<compile_context>
chip_gen: v7x
topology: tpu7x:2x2x1
jax: 0.10.0
libtpu: 0.0.40
codegen_flags: <defaults>
</compile_context>

<pallas_src>
import functools

import jax
import jax.numpy as jnp
from jax.experimental import pallas as pl
from jax.experimental.pallas import tpu as pltpu


def _dice_partials_kernel(x_ref, t_ref, out_ref, *, C, R, block_rows, need_mask):
    """Per-tile partial sums for the dice loss.

    x_ref, t_ref : (C, block_rows, 128) tiles  (channel-major, pixels dense)
    out_ref      : (8, 128) f32 slab; [0,0] = sum(softmax(x) . t), [1,0] = sum(t)
    """
    x = x_ref[...].astype(jnp.float32)   # (C, BR, 128)
    t = t_ref[...].astype(jnp.float32)   # (C, BR, 128)

    if need_mask:
        # Only the ragged last row-tile extends past the real extent; zero out
        # invalid rows (x -> 0 keeps exp() finite, t -> 0 kills contributions).
        row = pl.program_id(1) * block_rows + jax.lax.broadcasted_iota(
            jnp.int32, (1, block_rows, 128), 1)
        valid = row < R
        x = jnp.where(valid, x, 0.0)
        t = jnp.where(valid, t, 0.0)

    # Channel-wise max: unrolled over the small static C axis; every operand is
    # a dense (block_rows, 128) slab, so these are full-vreg elementwise ops.
    m = x[0]
    for c in range(1, C):
        m = jnp.maximum(m, x[c])

    # s   = sum_c exp(x_c - m)        (softmax denominator per pixel)
    # num = sum_c exp(x_c - m) * t_c  (unnormalised softmax . target per pixel)
    s = jnp.zeros_like(m)
    num = jnp.zeros_like(m)
    for c in range(C):
        e = jnp.exp(x[c] - m)
        s = s + e
        num = num + e * t[c]

    # One exact divide per pixel (tolerance-critical -> no approx reciprocal),
    # then reduce the tile to two scalars.
    num_part = jnp.sum(num / s)          # sum over tile of softmax(x) . t
    t_part = jnp.sum(t)                  # sum over tile of target

    # Lane-dense (8,128) output slab: row 0 -> numerator partial, row 1 -> t partial.
    row_i = jax.lax.broadcasted_iota(jnp.int32, (8, 128), 0)
    out_ref[...] = jnp.where(row_i == 0, num_part,
                             jnp.where(row_i == 1, t_part, 0.0))


def dice_loss_pallas(output, target, *, target_block_bytes=None):
    """output, target: (N, C, H, W) arrays (NCHW, matching PyTorch)."""
    N, C, H, W = output.shape
    HW = H * W
    itemsize = output.dtype.itemsize

    # ---- generation-aware defaults --------------------------------------
    try:
        vmem_cap = pltpu.get_tpu_info().vmem_capacity_bytes
    except Exception:  # not on a TPU / interpret mode
        vmem_cap = 128 * 1024 * 1024
    if vmem_cap >= 96 * 1024 * 1024:          # v5e / v6e: 128 MiB VMEM
        default_target_bytes = 8 * 1024 * 1024
        vmem_limit = 96 * 1024 * 1024
        min_steps = 4
    else:                                     # v7x: 64 MiB per-TC VMEM
        default_target_bytes = 4 * 1024 * 1024
        vmem_limit = 48 * 1024 * 1024
        min_steps = 8
    if target_block_bytes is None:
        target_block_bytes = default_target_bytes

    # ---- dense (N, C, R, 128) layout (free reshape; pad HW only if ragged) ----
    x = output.reshape(N, C, HW)
    t = target.reshape(N, C, HW)
    HW_pad = ((HW + 127) // 128) * 128
    if HW_pad != HW:
        pad = HW_pad - HW
        # Padded pixels: t == 0 -> contribute nothing to num or sum(t);
        # denominator uses the analytic N*HW (real), so no correction needed.
        x = jnp.pad(x, ((0, 0), (0, 0), (0, pad)))
        t = jnp.pad(t, ((0, 0), (0, 0), (0, pad)))
    R = HW_pad // 128
    x = x.reshape(N, C, R, 128)
    t = t.reshape(N, C, R, 128)

    # ---- pick block_rows: aligned, divides R if possible, enough grid steps ----
    row_align = 16 if itemsize == 2 else 8
    bytes_per_row = C * 128 * itemsize
    max_rows = max(row_align,
                   (target_block_bytes // bytes_per_row) // row_align * row_align)

    t_target = -(-min_steps // N)             # want T >= t_target grid steps
    rows_for_steps = R // max(t_target, 1)
    if rows_for_steps >= row_align:
        max_rows = min(max_rows, (rows_for_steps // row_align) * row_align)

    if R <= max_rows:
        block_rows = R                        # full extent (always legal)
    else:
        block_rows = 0
        for br in range(max_rows, row_align - 1, -row_align):
            if R % br == 0:                   # exact divisor -> no mask needed
                block_rows = br
                break
        if block_rows == 0:
            block_rows = max_rows             # ragged last tile, mask in-kernel

    T = pl.cdiv(R, block_rows)
    need_mask = (R % block_rows) != 0

    kernel = functools.partial(_dice_partials_kernel, C=C, R=R,
                               block_rows=block_rows, need_mask=need_mask)

    cost = pl.CostEstimate(
        flops=6 * N * C * HW_pad,
        transcendentals=N * C * HW_pad,
        bytes_accessed=2 * N * C * HW_pad * itemsize + N * T * 8 * 128 * 4,
    )

    partials = pl.pallas_call(
        kernel,
        out_shape=jax.ShapeDtypeStruct((N, T, 8, 128), jnp.float32),
        grid_spec=pltpu.PrefetchScalarGridSpec(
            num_scalar_prefetch=0,
            grid=(N, T),
            in_specs=[
                pl.BlockSpec((None, C, block_rows, 128), lambda n, h: (n, 0, h, 0)),
                pl.BlockSpec((None, C, block_rows, 128), lambda n, h: (n, 0, h, 0)),
            ],
            out_specs=pl.BlockSpec((None, None, 8, 128),
                                   lambda n, h: (n, h, 0, 0)),
        ),
        compiler_params=pltpu.CompilerParams(
            dimension_semantics=("parallel", "parallel"),
            vmem_limit_bytes=vmem_limit,
        ),
        cost_estimate=cost,
    )(x, t)

    # Tiny final reduction in the wrapper (keeps the grid fully parallel).
    softmax_dot_t = jnp.sum(partials[:, :, 0, 0])
    t_sum = jnp.sum(partials[:, :, 1, 0])

    num = 2.0 * softmax_dot_t
    # sum over channels of softmax is exactly 1 per pixel -> sum(p) == N*H*W.
    den = jnp.float32(N * HW) + t_sum
    return 1.0 - (num + 1.0) / (den + 1.0)


def dice_loss_ref(output, target):
    """Pure-JAX reference mirroring the PyTorch code."""
    p = jax.nn.softmax(output, axis=1)
    num = 2.0 * jnp.sum(p * target)
    den = jnp.sum(p + target)
    return 1.0 - (num + 1.0) / (den + 1.0)


if __name__ == "__main__":
    key = jax.random.PRNGKey(0)
    k1, k2 = jax.random.split(key)

    N, C, H, W = 2, 4, 16, 16
    output = jax.random.normal(k1, (N, C, H, W), dtype=jnp.float32)
    # target in [0, 1], same shape (dice loss expects a soft / one-hot mask)
    target = jax.random.uniform(k2, (N, C, H, W), dtype=jnp.float32)

    loss = dice_loss_pallas(output, target)
    loss = jax.block_until_ready(loss)

    ref = dice_loss_ref(output, target)
    assert jnp.allclose(loss, ref, atol=1e-5, rtol=1e-5), (loss, ref)

    print("KERNEL_OK")
</pallas_src>

<mosaic_0001>
module attributes {stable_mosaic.version = 11 : i64} {
  func.func @_dice_partials_kernel(%arg0: i32, %arg1: i32, %arg2: memref<1x4x2x128xf32, #tpu.memory_space<vmem>>, %arg3: memref<1x4x2x128xf32, #tpu.memory_space<vmem>>, %arg4: memref<1x1x8x128xf32, #tpu.memory_space<vmem>>) attributes {dimension_semantics = [#tpu.dimension_semantics<parallel>, #tpu.dimension_semantics<parallel>], iteration_bounds = array<i64: 2, 1>, scalar_prefetch = 0 : i64, scratch_operands = 0 : i64, tpu.core_type = #tpu.core_type<tc>, window_params = [{transform_indices = @transform_0, window_bounds = array<i64: 1, 4, 2, 128>}, {transform_indices = @transform_1, window_bounds = array<i64: 1, 4, 2, 128>}, {transform_indices = @transform_2, window_bounds = array<i64: 1, 1, 8, 128>}]} {
    %c0 = arith.constant 0 : index
    %c0_0 = arith.constant 0 : index
    %c0_1 = arith.constant 0 : index
    %c0_2 = arith.constant 0 : index
    %0 = vector.load %arg2[%c0, %c0_0, %c0_1, %c0_2] : memref<1x4x2x128xf32, #tpu.memory_space<vmem>>, vector<1x4x2x128xf32>
    %1 = vector.shape_cast %0 : vector<1x4x2x128xf32> to vector<4x2x128xf32>
    %c0_3 = arith.constant 0 : index
    %c0_4 = arith.constant 0 : index
    %c0_5 = arith.constant 0 : index
    %c0_6 = arith.constant 0 : index
    %2 = vector.load %arg3[%c0_3, %c0_4, %c0_5, %c0_6] : memref<1x4x2x128xf32, #tpu.memory_space<vmem>>, vector<1x4x2x128xf32>
    %3 = vector.shape_cast %2 : vector<1x4x2x128xf32> to vector<4x2x128xf32>
    %4 = vector.extract_strided_slice %1 {offsets = [0, 0, 0], sizes = [1, 2, 128], strides = [1, 1, 1]} : vector<4x2x128xf32> to vector<1x2x128xf32>
    %5 = vector.shape_cast %4 : vector<1x2x128xf32> to vector<2x128xf32>
    %6 = vector.extract_strided_slice %1 {offsets = [1, 0, 0], sizes = [1, 2, 128], strides = [1, 1, 1]} : vector<4x2x128xf32> to vector<1x2x128xf32>
    %7 = vector.shape_cast %6 : vector<1x2x128xf32> to vector<2x128xf32>
    %8 = arith.maximumf %5, %7 : vector<2x128xf32>
    %9 = vector.extract_strided_slice %1 {offsets = [2, 0, 0], sizes = [1, 2, 128], strides = [1, 1, 1]} : vector<4x2x128xf32> to vector<1x2x128xf32>
    %10 = vector.shape_cast %9 : vector<1x2x128xf32> to vector<2x128xf32>
    %11 = arith.maximumf %8, %10 : vector<2x128xf32>
    %12 = vector.extract_strided_slice %1 {offsets = [3, 0, 0], sizes = [1, 2, 128], strides = [1, 1, 1]} : vector<4x2x128xf32> to vector<1x2x128xf32>
    %13 = vector.shape_cast %12 : vector<1x2x128xf32> to vector<2x128xf32>
    %14 = arith.maximumf %11, %13 : vector<2x128xf32>
    %cst = arith.constant 0.000000e+00 : f32
    %15 = vector.broadcast %cst : f32 to vector<2x128xf32>
    %cst_7 = arith.constant 0.000000e+00 : f32
    %16 = vector.broadcast %cst_7 : f32 to vector<2x128xf32>
    %17 = vector.extract_strided_slice %1 {offsets = [0, 0, 0], sizes = [1, 2, 128], strides = [1, 1, 1]} : vector<4x2x128xf32> to vector<1x2x128xf32>
    %18 = vector.shape_cast %17 : vector<1x2x128xf32> to vector<2x128xf32>
    %19 = arith.subf %18, %14 : vector<2x128xf32>
    %20 = math.exp %19 : vector<2x128xf32>
    %21 = arith.addf %15, %20 : vector<2x128xf32>
    %22 = vector.extract_strided_slice %3 {offsets = [0, 0, 0], sizes = [1, 2, 128], strides = [1, 1, 1]} : vector<4x2x128xf32> to vector<1x2x128xf32>
    %23 = vector.shape_cast %22 : vector<1x2x128xf32> to vector<2x128xf32>
    %24 = arith.mulf %20, %23 : vector<2x128xf32>
    %25 = arith.addf %16, %24 : vector<2x128xf32>
    %26 = vector.extract_strided_slice %1 {offsets = [1, 0, 0], sizes = [1, 2, 128], strides = [1, 1, 1]} : vector<4x2x128xf32> to vector<1x2x128xf32>
    %27 = vector.shape_cast %26 : vector<1x2x128xf32> to vector<2x128xf32>
    %28 = arith.subf %27, %14 : vector<2x128xf32>
    %29 = math.exp %28 : vector<2x128xf32>
    %30 = arith.addf %21, %29 : vector<2x128xf32>
    %31 = vector.extract_strided_slice %3 {offsets = [1, 0, 0], sizes = [1, 2, 128], strides = [1, 1, 1]} : vector<4x2x128xf32> to vector<1x2x128xf32>
    %32 = vector.shape_cast %31 : vector<1x2x128xf32> to vector<2x128xf32>
    %33 = arith.mulf %29, %32 : vector<2x128xf32>
    %34 = arith.addf %25, %33 : vector<2x128xf32>
    %35 = vector.extract_strided_slice %1 {offsets = [2, 0, 0], sizes = [1, 2, 128], strides = [1, 1, 1]} : vector<4x2x128xf32> to vector<1x2x128xf32>
    %36 = vector.shape_cast %35 : vector<1x2x128xf32> to vector<2x128xf32>
    %37 = arith.subf %36, %14 : vector<2x128xf32>
    %38 = math.exp %37 : vector<2x128xf32>
    %39 = arith.addf %30, %38 : vector<2x128xf32>
    %40 = vector.extract_strided_slice %3 {offsets = [2, 0, 0], sizes = [1, 2, 128], strides = [1, 1, 1]} : vector<4x2x128xf32> to vector<1x2x128xf32>
    %41 = vector.shape_cast %40 : vector<1x2x128xf32> to vector<2x128xf32>
    %42 = arith.mulf %38, %41 : vector<2x128xf32>
    %43 = arith.addf %34, %42 : vector<2x128xf32>
    %44 = vector.extract_strided_slice %1 {offsets = [3, 0, 0], sizes = [1, 2, 128], strides = [1, 1, 1]} : vector<4x2x128xf32> to vector<1x2x128xf32>
    %45 = vector.shape_cast %44 : vector<1x2x128xf32> to vector<2x128xf32>
    %46 = arith.subf %45, %14 : vector<2x128xf32>
    %47 = math.exp %46 : vector<2x128xf32>
    %48 = arith.addf %39, %47 : vector<2x128xf32>
    %49 = vector.extract_strided_slice %3 {offsets = [3, 0, 0], sizes = [1, 2, 128], strides = [1, 1, 1]} : vector<4x2x128xf32> to vector<1x2x128xf32>
    %50 = vector.shape_cast %49 : vector<1x2x128xf32> to vector<2x128xf32>
    %51 = arith.mulf %47, %50 : vector<2x128xf32>
    %52 = arith.addf %43, %51 : vector<2x128xf32>
    %53 = arith.divf %52, %48 : vector<2x128xf32>
    %54 = vector.shape_cast %53 : vector<2x128xf32> to vector<1x2x128xf32>
    %cst_8 = arith.constant dense<0.000000e+00> : vector<1xf32>
    %55 = vector.multi_reduction <add>, %54, %cst_8 [1, 2] : vector<1x2x128xf32> to vector<1xf32>
    %56 = vector.shape_cast %55 : vector<1xf32> to vector<1x1x1xf32>
    %57 = vector.extract %56[0, 0, 0] : f32 from vector<1x1x1xf32>
    %58 = vector.shape_cast %3 : vector<4x2x128xf32> to vector<1x4x2x128xf32>
    %cst_9 = arith.constant dense<0.000000e+00> : vector<1xf32>
    %59 = vector.multi_reduction <add>, %58, %cst_9 [1, 2, 3] : vector<1x4x2x128xf32> to vector<1xf32>
    %60 = vector.shape_cast %59 : vector<1xf32> to vector<1x1x1x1xf32>
    %61 = vector.extract %60[0, 0, 0, 0] : f32 from vector<1x1x1x1xf32>
    %62 = tpu.iota {dimensions = array<i32: 0>} : vector<8x128xi32>
    %c0_i32 = arith.constant 0 : i32
    %63 = vector.broadcast %c0_i32 : i32 to vector<8x128xi32>
    %64 = arith.cmpi eq, %62, %63 : vector<8x128xi32>
    %c1_i32 = arith.constant 1 : i32
    %65 = vector.broadcast %c1_i32 : i32 to vector<8x128xi32>
    %66 = arith.cmpi eq, %62, %65 : vector<8x128xi32>
    %cst_10 = arith.constant 0.000000e+00 : f32
    %67 = vector.broadcast %61 : f32 to vector<8x128xf32>
    %68 = vector.broadcast %cst_10 : f32 to vector<8x128xf32>
    %69 = arith.select %66, %67, %68 : vector<8x128xi1>, vector<8x128xf32>
    %70 = vector.broadcast %57 : f32 to vector<8x128xf32>
    %71 = arith.select %64, %70, %69 : vector<8x128xi1>, vector<8x128xf32>
    %c0_11 = arith.constant 0 : index
    %c0_12 = arith.constant 0 : index
    %c0_13 = arith.constant 0 : index
    %c0_14 = arith.constant 0 : index
    %72 = vector.load %arg4[%c0_11, %c0_12, %c0_13, %c0_14] : memref<1x1x8x128xf32, #tpu.memory_space<vmem>>, vector<1x1x8x128xf32>
    %73 = vector.shape_cast %72 : vector<1x1x8x128xf32> to vector<8x128xf32>
    %74 = vector.shape_cast %71 : vector<8x128xf32> to vector<1x1x8x128xf32>
    tpu.vector_store %arg4[%c0_11, %c0_12, %c0_13, %c0_14], %74 {strides = array<i32>} : memref<1x1x8x128xf32, #tpu.memory_space<vmem>>, vector<1x1x8x128xf32>,
    return
  }
  func.func @transform_0(%arg0: i32, %arg1: i32) -> (i32, i32, i32, i32) {
    %c0_i32 = arith.constant 0 : i32
    %c0_i32_0 = arith.constant 0 : i32
    %c0_i32_1 = arith.constant 0 : i32
    return %arg0, %c0_i32, %arg1, %c0_i32_0 : i32, i32, i32, i32
  }
  func.func @transform_1(%arg0: i32, %arg1: i32) -> (i32, i32, i32, i32) {
    %c0_i32 = arith.constant 0 : i32
    %c0_i32_0 = arith.constant 0 : i32
    %c0_i32_1 = arith.constant 0 : i32
    return %arg0, %c0_i32, %arg1, %c0_i32_0 : i32, i32, i32, i32
  }
  func.func @transform_2(%arg0: i32, %arg1: i32) -> (i32, i32, i32, i32) {
    %c0_i32 = arith.constant 0 : i32
    %c0_i32_0 = arith.constant 0 : i32
    %c0_i32_1 = arith.constant 0 : i32
    return %arg0, %arg1, %c0_i32, %c0_i32_0 : i32, i32, i32, i32
  }
}

</mosaic_0001>

<llo_original>
// kernel: tpu_custom_call.1
$region0: #{tpu_custom_call.1}
  #allocation0 [shape = 'u32[]', space=smem, size = 0x4, offset = 0x4, fixed_abs, tag = 'smem constant byte address 0x4 - core index']
  #allocation1 [shape = 'u32[144,128]{1,0:T(1,128)}', space=vmem, size = 0x12000, scoped, tag = 'internal scratch']
  %s0 = inlined_call_operand.hbm [shape: f32[2,4,2,128], index: 0, kind: input, shape index: {}]
  %s1 = inlined_call_operand.hbm [shape: f32[2,4,2,128], index: 1, kind: input, shape index: {}]
  %s2 = inlined_call_operand.hbm [shape: f32[2,1,8,128], index: 2, kind: output, shape index: {}]
  %s3 = sld [smem:[#allocation0]]
  $region49: #{tpu_custom_call.1} parent=0
    _
  %s5 = ssub.s32 1, %s3
  %s6 = scalar_select 0, %s5, %s3
  $region1: #{tpu_custom_call.1} parent=0
    #allocation2 [shape = 'u8[8192]{0}', space=vmem, size = 0x2000, scoped, tag = 'input window, operand 0']
    #allocation3 [shape = 's32[2]{0}', space=sflag, size = 0x8, scoped, tag = 'scoped memory for tpu_custom_call.1']
    #allocation4 [shape = 's32[2]{0}', space=sflag, size = 0x8, scoped, tag = 'scoped memory for tpu_custom_call.1']
    #allocation5 [shape = 'u8[8192]{0}', space=vmem, size = 0x2000, scoped, tag = 'input window, operand 1']
    #allocation6 [shape = 's32[2]{0}', space=sflag, size = 0x8, scoped, tag = 'scoped memory for tpu_custom_call.1']
    #allocation7 [shape = 'u8[8192]{0}', space=vmem, size = 0x2000, scoped, tag = 'output window, operand 0']
    %7 = vsyncpa [#allocation3], 0
    %s8 = scalar_lea.sflag [#allocation3], 1
    %9 = vsyncpa %s8, 0
    %10 = vsyncpa [#allocation6], 0
    %s11 = scalar_lea.sflag [#allocation6], 1
    %12 = vsyncpa %s11, 0
    %13 = vsyncpa [#allocation4], 0
    %s14 = scalar_lea.sflag [#allocation4], 1
    %15 = vsyncpa %s14, 0
    loop: start=0, step=1, limit=4
    $region2: #{tpu_custom_call.1} parent=1 // loop_pre_header
      _
    $region3: #{tpu_custom_call.1} parent=1 // loop_header
      %s17 = sphi 0, %s21
      %p18 = scmp.ge.s32.totalorder %s17, 4
      %s24 = sphi 0, %s36
      %s25 = sphi 0, %s32
      %s26 = sphi 0, %s24
      %s27 = sphi 0, %s25
      %s28 = sphi 0, %s26
      %s29 = sphi 0, %s27
      %s41 = sphi 0, %s43
      %s44 = sphi 0, %s41
      %s45 = sphi 0, %s44
      %s61 = sphi 0, %s45
      %s69 = sphi 0, %s71
      %s72 = sphi 0, %s69
      %s73 = sphi 0, %s72
      %s89 = sphi 0, %s73
      %s97 = sphi 0, %s99
      %s100 = sphi 0, %s97
      %s101 = sphi 0, %s100
      %s117 = sphi 0, %s101
    $region4: #{tpu_custom_call.1} parent=1 // loop_header_branch
      %20 = sbr.rel (%p18) target = $region8
    $region5: #{tpu_custom_call.1} parent=1 // loop_body
      %s22 = ssub.s32 %s17, 1
      %s23 = ssub.s32 %s17, 2
      %s30 = sadd.s32 1, %s25
      %p31 = scmp.ge.s32.totalorder %s30, 1
      %s32 = scalar_select %p31, 0, %s30
      %s33 = sadd.s32 1, %s24
      %s34 = scalar_select %p31, %s33, %s24
      %p35 = scmp.ge.s32.totalorder %s34, 2
      %s36 = scalar_select %p35, 0, %s34
      %s37 = ssub.s32 %s24, %s36
      %s38 = ssub.s32 %s25, %s32
      %s39 = sor.u32 %s37, %s38
      %p40 = scmp.eq.s32.totalorder %s39, 0
      %s42 = sadd.s32 %s41, 1
      %s43 = scalar_select %p40, %s41, %s42
      %p46 = pneg %p40
      %p47 = scmp.eq.s32.totalorder %s17, 1
      %p48 = por %p46, %p47
      %p49 = scmp.ne.s32.totalorder %s41, %s44
      %p50 = scmp.eq.s32.totalorder %s17, 0
      %p51 = por %p49, %p50
      %p52 = scmp.ne.s32.totalorder %s41, %s44
      %p53 = scmp.eq.s32.totalorder %s22, 1
      %p54 = por %p52, %p53
      %p55 = scmp.ne.s32.totalorder %s44, %s45
      %p56 = scmp.eq.s32.totalorder %s22, 0
      %p57 = por %p55, %p56
      %p58 = scmp.ne.s32.totalorder %s44, %s45
      %p59 = scmp.eq.s32.totalorder %s23, 1
      %p60 = por %p58, %p59
      %p62 = scmp.ne.s32.totalorder %s45, %s61
      %p63 = scmp.eq.s32.totalorder %s23, 0
      %p64 = por %p62, %p63
      %s65 = ssub.s32 %s24, %s36
      %s66 = ssub.s32 %s25, %s32
      %s67 = sor.u32 %s65, %s66
      %p68 = scmp.eq.s32.totalorder %s67, 0
      %s70 = sadd.s32 %s69, 1
      %s71 = scalar_select %p68, %s69, %s70
      %p74 = pneg %p68
      %p75 = scmp.eq.s32.totalorder %s17, 1
      %p76 = por %p74, %p75
      %p77 = scmp.ne.s32.totalorder %s69, %s72
      %p78 = scmp.eq.s32.totalorder %s17, 0
      %p79 = por %p77, %p78
      %p80 = scmp.ne.s32.totalorder %s69, %s72
      %p81 = scmp.eq.s32.totalorder %s22, 1
      %p82 = por %p80, %p81
      %p83 = scmp.ne.s32.totalorder %s72, %s73
      %p84 = scmp.eq.s32.totalorder %s22, 0
      %p85 = por %p83, %p84
      %p86 = scmp.ne.s32.totalorder %s72, %s73
      %p87 = scmp.eq.s32.totalorder %s23, 1
      %p88 = por %p86, %p87
      %p90 = scmp.ne.s32.totalorder %s73, %s89
      %p91 = scmp.eq.s32.totalorder %s23, 0
      %p92 = por %p90, %p91
      %s93 = ssub.s32 %s24, %s36
      %s94 = ssub.s32 %s25, %s32
      %s95 = sor.u32 %s93, %s94
      %p96 = scmp.eq.s32.totalorder %s95, 0
      %s98 = sadd.s32 %s97, 1
      %s99 = scalar_select %p96, %s97, %s98
      %p102 = pneg %p96
      %p103 = scmp.eq.s32.totalorder %s17, 1
      %p104 = por %p102, %p103
      %p105 = scmp.ne.s32.totalorder %s97, %s100
      %p106 = scmp.eq.s32.totalorder %s17, 0
      %p107 = por %p105, %p106
      %p108 = scmp.ne.s32.totalorder %s97, %s100
      %p109 = scmp.eq.s32.totalorder %s22, 1
      %p110 = por %p108, %p109
      %p111 = scmp.ne.s32.totalorder %s100, %s101
      %p112 = scmp.eq.s32.totalorder %s22, 0
      %p113 = por %p111, %p112
      %p114 = scmp.ne.s32.totalorder %s100, %s101
      %p115 = scmp.eq.s32.totalorder %s23, 1
      %p116 = por %p114, %p115
      %p118 = scmp.ne.s32.totalorder %s101, %s117
      %p119 = scmp.eq.s32.totalorder %s23, 0
      %p120 = por %p118, %p119
      %p121 = scmp.le.s32.totalorder 1, %s17
      %p122 = scmp.lt.s32.totalorder %s17, 3
      %p123 = pnand %p121, %p122
      %p124 = pneg %p123
      // Predicated region
      $region9: #{tpu_custom_call.1} parent=5 // pred_check
        _
      $region10: #{tpu_custom_call.1} parent=5 // pred_check_branch
        %126 = sbr.rel (%p123) target = $region12
      $region11: #{tpu_custom_call.1} parent=5 // pred_region
        %s127 = ssub.s32 %s17, 1
      $region12: #{tpu_custom_call.1} parent=5 // pred_fallthru
        _
      %p128 = scmp.lt.s32.totalorder %s17, 2
      // Predicated region
      $region13: #{tpu_custom_call.1} parent=5 // pred_check
        %p129 = pneg %p128
      $region14: #{tpu_custom_call.1} parent=5 // pred_check_branch
        %131 = sbr.rel (%p129) target = $region16
      $region15: #{tpu_custom_call.1} parent=5 // pred_region
        // Predicated region
        $region17: #{tpu_custom_call.1} parent=15 // pred_check
          %p132 = pneg %p51
        $region18: #{tpu_custom_call.1} parent=15 // pred_check_branch
          %134 = sbr.rel (%p132) target = $region20
        $region19: #{tpu_custom_call.1} parent=15 // pred_region
          %s135 = sand.u32 %s41, 1
          %s136 = scalar_lea.sflag [#allocation3], %s135
          %s137 = sand.u32 %s41, 1
          %s138 = smul.addr %s137, 8
          %s139 = scalar_lea.vmem [#allocation2], %s138
          %s141 = ssub.s32 128, 128
          %142 = vsyncadd %s136, %s141
          %s143 = smul.addr %s24, 4
          %s144 = sadd.s32 %s25, %s143
          %s145 = smul.addr %s144, 32
          %s146 = scalar_lea.hbm %s0, %s145
          %s147 = sshll.u32 %s139, 4
          %s148 = int_to_ptr.vmem [resolvable:$true] %s147
          %153 = dma.hbm_to_vmem [thread:$0]  %s146, 128, %s148, %s136, 32, 32, 2
        $region20: #{tpu_custom_call.1} parent=15 // pred_fallthru
          _
        // Predicated region
        $region21: #{tpu_custom_call.1} parent=15 // pred_check
          %p154 = pneg %p79
        $region22: #{tpu_custom_call.1} parent=15 // pred_check_branch
          %156 = sbr.rel (%p154) target = $region24
        $region23: #{tpu_custom_call.1} parent=15 // pred_region
          %s157 = sand.u32 %s69, 1
          %s158 = scalar_lea.sflag [#allocation6], %s157
          %s159 = sand.u32 %s69, 1
          %s160 = smul.addr %s159, 8
          %s161 = scalar_lea.vmem [#allocation5], %s160
          %s163 = ssub.s32 128, 128
          %164 = vsyncadd %s158, %s163
          %s165 = smul.addr %s24, 4
          %s166 = sadd.s32 %s25, %s165
          %s167 = smul.addr %s166, 32
          %s168 = scalar_lea.hbm %s1, %s167
          %s169 = sshll.u32 %s161, 4
          %s170 = int_to_ptr.vmem [resolvable:$true] %s169
          %175 = dma.hbm_to_vmem [thread:$0]  %s168, 128, %s170, %s158, 32, 32, 2
        $region24: #{tpu_custom_call.1} parent=15 // pred_fallthru
          _
      $region16: #{tpu_custom_call.1} parent=5 // pred_fallthru
        _
      %p176 = scmp.le.s32.totalorder 1, %s17
      %p177 = scmp.lt.s32.totalorder %s17, 3
      %p178 = pnand %p176, %p177
      %p179 = pneg %p178
      // Predicated region
      $region25: #{tpu_custom_call.1} parent=5 // pred_check
        _
      $region26: #{tpu_custom_call.1} parent=5 // pred_check_branch
        %181 = sbr.rel (%p178) target = $region28
      $region27: #{tpu_custom_call.1} parent=5 // pred_region
        %s182 = ssub.s32 %s17, 1
        %s183 = sand.u32 %s44, 1
        %s184 = scalar_lea.sflag [#allocation3], %s183
        %s185 = sand.u32 %s44, 1
        %s186 = smul.addr %s185, 8
        %s187 = scalar_lea.vmem [#allocation2], %s186
        // Predicated region
        $region29: #{tpu_custom_call.1} parent=27 // pred_check
          %p188 = pneg %p57
        $region30: #{tpu_custom_call.1} parent=27 // pred_check_branch
          %190 = sbr.rel (%p188) target = $region32
        $region31: #{tpu_custom_call.1} parent=27 // pred_region
          %191 = dma.done %s184, 128
        $region32: #{tpu_custom_call.1} parent=27 // pred_fallthru
          _
        %s192 = sand.u32 %s72, 1
        %s193 = scalar_lea.sflag [#allocation6], %s192
        %s194 = sand.u32 %s72, 1
        %s195 = smul.addr %s194, 8
        %s196 = scalar_lea.vmem [#allocation5], %s195
        // Predicated region
        $region33: #{tpu_custom_call.1} parent=27 // pred_check
          %p197 = pneg %p85
        $region34: #{tpu_custom_call.1} parent=27 // pred_check_branch
          %199 = sbr.rel (%p197) target = $region36
        $region35: #{tpu_custom_call.1} parent=27 // pred_region
          %200 = dma.done %s193, 128
        $region36: #{tpu_custom_call.1} parent=27 // pred_fallthru
          _
        %s201 = sand.u32 %s44, 1
        %s202 = scalar_lea.sflag [#allocation3], %s201
        %s203 = sand.u32 %s44, 1
        %s204 = smul.addr %s203, 8
        %s205 = scalar_lea.vmem [#allocation2], %s204
        %p206 = pneg %p57
        %p207 = pneg %p54
        %s208 = sand.u32 %s72, 1
        %s209 = scalar_lea.sflag [#allocation6], %s208
        %s210 = sand.u32 %s72, 1
        %s211 = smul.addr %s210, 8
        %s212 = scalar_lea.vmem [#allocation5], %s211
        %p213 = pneg %p85
        %p214 = pneg %p82
        %p215 = pneg %p113
        %p216 = pneg %p110
        %s217 = sand.u32 %s100, 1
        %s218 = scalar_lea.sflag [#allocation4], %s217
        %s219 = sand.u32 %s100, 1
        %s220 = smul.addr %s219, 8
        %s221 = scalar_lea.vmem [#allocation7], %s220
        %v222 = vld [vmem:[%s187] sm:$0x3]
        %v223 = vld [vmem:[%s187 + $0x2] sm:$0x3]
        %v224 = vld [vmem:[%s187 + $0x4] sm:$0x3]
        %v225 = vld [vmem:[%s187 + $0x6] sm:$0x3]
        %v226 = vld [vmem:[%s196] sm:$0x3]
        %v227 = vld [vmem:[%s196 + $0x2] sm:$0x3]
        %v228 = vld [vmem:[%s196 + $0x4] sm:$0x3]
        %v229 = vld [vmem:[%s196 + $0x6] sm:$0x3]
        %v230 = vmax.f32 %v222, %v223
        %v231 = vmax.f32 %v230, %v224
        %v232 = vmax.f32 %v231, %v225
        %v233 = vsub.f32 %v222, %v232
        %v234 = vmul.f32 %v233, 1.442695
        %v235 = vpow.pop %v234
        %v236 = vadd.f32 %v235, 0.0
        %v237 = vmul.f32 %v235, %v226
        %v238 = vadd.f32 %v237, 0.0
        %v239 = vsub.f32 %v223, %v232
        %v240 = vmul.f32 %v239, 1.442695
        %v241 = vpow.pop %v240
        %v242 = vadd.f32 %v236, %v241
        %v243 = vmul.f32 %v241, %v227
        %v244 = vadd.f32 %v238, %v243
        %v245 = vsub.f32 %v224, %v232
        %v246 = vmul.f32 %v245, 1.442695
        %v247 = vpow.pop %v246
        %v248 = vadd.f32 %v242, %v247
        %v249 = vmul.f32 %v247, %v228
        %v250 = vadd.f32 %v244, %v249
        %v251 = vsub.f32 %v225, %v232
        %v252 = vmul.f32 %v251, 1.442695
        %v253 = vpow.pop %v252
        %v254 = vadd.f32 %v248, %v253
        %v255 = vmul.f32 %v253, %v229
        %v256 = vadd.f32 %v250, %v255
        %v257 = vrcp.pop %v254
        %v258 = vmul.f32 %v256, %v257
        %vm259 = vcmask 1041408
        %v260 = vsel %vm259, %v258, 0.0
        %261 = vadd.xlane.f32.xlu0 %v260
        %v262 = vpop.xlane.xlu0 %261
        %v263 = vrot.slane %v262, 4
        %v264 = vadd.f32 %v262, %v263
        %v265 = vrot.slane %v264, 2
        %v266 = vadd.f32 %v264, %v265
        %v267 = vrot.slane %v266, 1
        %v268 = vadd.f32 %v266, %v267
        %s269 = vtos %v268
        %v270 = vsel %vm259, %v226, 0.0
        %v271 = vsel %vm259, %v227, 0.0
        %v272 = vadd.f32 %v270, %v271
        %v273 = vsel %vm259, %v228, 0.0
        %v274 = vadd.f32 %v272, %v273
        %v275 = vsel %vm259, %v229, 0.0
        %v276 = vadd.f32 %v274, %v275
        %277 = vadd.xlane.f32.xlu0 %v276
        %v278 = vpop.xlane.xlu0 %277
        %v279 = vrot.slane %v278, 4
        %v280 = vadd.f32 %v278, %v279
        %v281 = vrot.slane %v280, 2
        %v282 = vadd.f32 %v280, %v281
        %v283 = vrot.slane %v282, 1
        %v284 = vadd.f32 %v282, %v283
        %s285 = vtos %v284
        %v286 = vlaneseq
        %v287 = vshrl.u32 %v286, 7
        %vm288 = vcmp.eq.s32.totalorder %v287, 0
        %vm289 = vcmp.eq.s32.totalorder %v287, 1
        %v290 = vstv %s285
        %v291 = vsel %vm289, %v290, 0.0
        %v292 = vstv %s269
        %v293 = vsel %vm288, %v292, %v291
        %294 = vst [vmem:[%s221] sm:$0xff] %v293
        %s295 = sand.u32 %s100, 1
        %s296 = scalar_lea.sflag [#allocation4], %s295
        %s297 = sand.u32 %s100, 1
        %s298 = smul.addr %s297, 8
        %s299 = scalar_lea.vmem [#allocation7], %s298
        // Predicated region
        $region37: #{tpu_custom_call.1} parent=27 // pred_check
          %p300 = pneg %p110
        $region38: #{tpu_custom_call.1} parent=27 // pred_check_branch
          %302 = sbr.rel (%p300) target = $region40
        $region39: #{tpu_custom_call.1} parent=27 // pred_region
          %s304 = ssub.s32 128, 128
          %305 = vsyncadd %s296, %s304
          %s306 = sadd.s32 %s27, %s26
          %s307 = smul.addr %s306, 128
          %s308 = scalar_lea.hbm %s2, %s307
          %s310 = sshll.u32 %s299, 4
          %s311 = int_to_ptr.vmem [resolvable:$true] %s310
          %313 = dma.vmem_to_hbm [thread:$0]  %s311, 128, %s308, %s296
        $region40: #{tpu_custom_call.1} parent=27 // pred_fallthru
          _
      $region28: #{tpu_custom_call.1} parent=5 // pred_fallthru
        _
      %p314 = scmp.le.s32.totalorder 2, %s17
      // Predicated region
      $region41: #{tpu_custom_call.1} parent=5 // pred_check
        %p315 = pneg %p314
      $region42: #{tpu_custom_call.1} parent=5 // pred_check_branch
        %317 = sbr.rel (%p315) target = $region44
      $region43: #{tpu_custom_call.1} parent=5 // pred_region
        %s318 = ssub.s32 %s17, 2
        // Predicated region
        $region45: #{tpu_custom_call.1} parent=43 // pred_check
          %p319 = pneg %p116
        $region46: #{tpu_custom_call.1} parent=43 // pred_check_branch
          %321 = sbr.rel (%p319) target = $region48
        $region47: #{tpu_custom_call.1} parent=43 // pred_region
          %s322 = sand.u32 %s101, 1
          %s323 = scalar_lea.sflag [#allocation4], %s322
          %s324 = sand.u32 %s101, 1
          %s325 = smul.addr %s324, 8
          %s326 = scalar_lea.vmem [#allocation7], %s325
          %327 = dma.done %s323, 128
        $region48: #{tpu_custom_call.1} parent=43 // pred_fallthru
          _
      $region44: #{tpu_custom_call.1} parent=5 // pred_fallthru
        _
    $region6: #{tpu_custom_call.1} parent=1 // loop_footer
      %s21 = sadd.s32 1, %s17
    $region7: #{tpu_custom_call.1} parent=1 // loop_footer_branch
      %16 = sbr.rel target = $region3
    $region8: #{tpu_custom_call.1} parent=1 // loop_exit
      _
    %328 = vsyncpa [#allocation3], 1
    %s329 = scalar_lea.sflag [#allocation3], 1
    %330 = vsyncpa %s329, 1
    %331 = vsyncpa [#allocation6], 1
    %s332 = scalar_lea.sflag [#allocation6], 1
    %333 = vsyncpa %s332, 1
    %334 = vsyncpa [#allocation4], 1
    %s335 = scalar_lea.sflag [#allocation4], 1
    %336 = vsyncpa %s335, 1

</llo_original>
